<compile_context>
chip_gen: v5e
topology: v5e:2x2
jax: 0.10.0
libtpu: 0.0.40
codegen_flags: <defaults>
</compile_context>

<pallas_src>
import functools
import numpy as np
import jax
import jax.numpy as jnp
from jax.experimental import pallas as pl
from jax.experimental.pallas import tpu as pltpu

# ----------------------------- model sizes (small) -----------------------------
PARAM_DIM = 256
HIDDEN_DIM = 128
RANK = 64
TIME_H1 = 32   # time_embed: Linear(1, 32) -> SiLU -> Linear(32, 64)
TIME_H2 = 64
LN_EPS = 1e-5

# --------------------------------- kernel helpers -------------------------------
def _layernorm(x, w, b):
    mu = jnp.mean(x, axis=-1, keepdims=True)
    xc = x - mu
    var = jnp.mean(xc * xc, axis=-1, keepdims=True)
    inv = jax.lax.rsqrt(var + LN_EPS)
    return xc * inv * w + b


def _gelu_exact(x):
    # PyTorch nn.GELU() default is the exact (erf) formulation.
    return 0.5 * x * (1.0 + jax.lax.erf(x * 0.7071067811865476))


def _silu(x):
    # exact sigmoid (EUP exp + divide); approx reciprocal not worth the drift.
    return x / (1.0 + jnp.exp(-x))


def _bf16(x):
    return x.astype(jnp.bfloat16)


def _net_body(z_f32, t_contrib,
              ln_in_w, ln_in_b, w_A, b_fused, ln1_w, ln1_b,
              w_m2, b_m2, ln2_w, ln2_b, w_out, b_out):
    """Shared forward body.  z_f32: (TB, PARAM_DIM) f32.
    t_contrib: time-embedding contribution to layer-1 pre-activation,
    either (TB, HIDDEN) or (1, HIDDEN) (broadcast)."""
    z_norm = _layernorm(z_f32, ln_in_w, ln_in_b)
    # fused low_rank_proj + main_net[0] (z half): single K=256 -> N=128 matmul
    h1 = (jnp.dot(_bf16(z_norm), w_A, preferred_element_type=jnp.float32)
          + t_contrib + b_fused)
    h1 = _gelu_exact(_layernorm(h1, ln1_w, ln1_b))
    # Dropout is the identity here (eval semantics).
    # TODO(synk): training-mode stochastic dropout would need pltpu.prng_* masks.
    h2 = jnp.dot(_bf16(h1), w_m2, preferred_element_type=jnp.float32) + b_m2
    h2 = _gelu_exact(_layernorm(h2, ln2_w, ln2_b))
    # fused (main_net output projection @ inv_proj): single K=HIDDEN matmul
    return jnp.dot(_bf16(h2), w_out, preferred_element_type=jnp.float32) + b_out


# --------------------------------- kernels --------------------------------------
def flow_matching_fwd_kernel(
    z_ref, t_ref,
    ln_in_w, ln_in_b, w_t1, b_t1, w_A, w_B, b_fused,
    ln1_w, ln1_b, w_m2, b_m2, ln2_w, ln2_b, w_out, b_out,
    out_ref,
):
    z = z_ref[...].astype(jnp.float32)     # bf16 or f32 at HBM boundary
    t = t_ref[...].astype(jnp.float32)     # (TB, 1)

    # time_embed: Linear(1,32) K=1 -> VPU outer product; fused Linear(32,·)@w_m1b.
    h_t = _silu(t * w_t1[...] + b_t1[...])                               # (TB, 32)
    t_contrib = jnp.dot(_bf16(h_t), w_B[...],
                        preferred_element_type=jnp.float32)              # (TB, HIDDEN)

    out = _net_body(z, t_contrib,
                    ln_in_w[...], ln_in_b[...], w_A[...], b_fused[...],
                    ln1_w[...], ln1_b[...], w_m2[...], b_m2[...],
                    ln2_w[...], ln2_b[...], w_out[...], b_out[...])
    out_ref[...] = out.astype(out_ref.dtype)


def flow_matching_generate_kernel(
    z_ref,
    ln_in_w, ln_in_b, w_t1, b_t1, w_A, w_B, b_fused,
    ln1_w, ln1_b, w_m2, b_m2, ln2_w, ln2_b, w_out, b_out,
    out_ref, z_state,
    *, num_steps, clamp_val,
):
    """In-kernel Euler sampling loop: weights + z stay VMEM-resident across all
    timesteps; only the final z is written back to HBM."""
    z_state[...] = z_ref[...].astype(jnp.float32)
    dt = 1.0 / float(num_steps)

    @pl.loop(0, num_steps)
    def _(step):
        t_val = 1.0 - jax.lax.convert_element_type(step, jnp.float32) * dt
        # t is a single scalar shared by all rows -> (1, ·) time embedding.
        h_t = _silu(t_val * w_t1[...] + b_t1[...])                       # (1, 32)
        t_contrib = jnp.dot(_bf16(h_t), w_B[...],
                            preferred_element_type=jnp.float32)          # (1, HIDDEN)
        z = z_state[...]
        pred = _net_body(z, t_contrib,
                         ln_in_w[...], ln_in_b[...], w_A[...], b_fused[...],
                         ln1_w[...], ln1_b[...], w_m2[...], b_m2[...],
                         ln2_w[...], ln2_b[...], w_out[...], b_out[...])
        z_new = jnp.clip(z + pred * dt, -clamp_val, clamp_val)
        # torch.nan_to_num(nan=0, posinf=clamp, neginf=-clamp) after the clamp:
        # only the NaN case survives (clip already bounds +/-inf).
        z_state[...] = jnp.where(jnp.isnan(z_new), 0.0, z_new)

    out_ref[...] = z_state[...].astype(out_ref.dtype)
    # TODO(synk): per-step trajectory / prediction snapshots (generate()'s viz
    #             outputs) are not DMA'd back; only the final z is returned.


# ------------------------------ parameter init ----------------------------------
def _xavier_normal(key, fan_in, fan_out, gain=0.02):
    std = gain * np.sqrt(2.0 / (fan_in + fan_out))
    return (std * jax.random.normal(key, (fan_in, fan_out))).astype(jnp.float32)


def init_params(key):
    """Full-precision parameters, matching the PyTorch module structure."""
    keys = jax.random.split(key, 8)
    p = {}
    p["ln_in_w"] = jnp.ones((1, PARAM_DIM), jnp.float32)
    p["ln_in_b"] = jnp.zeros((1, PARAM_DIM), jnp.float32)
    p["w_lr"] = _xavier_normal(keys[0], PARAM_DIM, RANK)
    p["b_lr"] = jnp.zeros((1, RANK), jnp.float32)
    p["w_t1"] = _xavier_normal(keys[1], 1, TIME_H1)
    p["b_t1"] = jnp.zeros((1, TIME_H1), jnp.float32)
    p["w_t2"] = _xavier_normal(keys[2], TIME_H1, TIME_H2)
    p["b_t2"] = jnp.zeros((1, TIME_H2), jnp.float32)
    p["w_m1"] = _xavier_normal(keys[3], RANK + TIME_H2, HIDDEN_DIM)
    p["b_m1"] = jnp.zeros((1, HIDDEN_DIM), jnp.float32)
    p["ln1_w"] = jnp.ones((1, HIDDEN_DIM), jnp.float32)
    p["ln1_b"] = jnp.zeros((1, HIDDEN_DIM), jnp.float32)
    p["w_m2"] = _xavier_normal(keys[4], HIDDEN_DIM, HIDDEN_DIM)
    p["b_m2"] = jnp.zeros((1, HIDDEN_DIM), jnp.float32)
    p["ln2_w"] = jnp.ones((1, HIDDEN_DIM), jnp.float32)
    p["ln2_b"] = jnp.zeros((1, HIDDEN_DIM), jnp.float32)
    p["w_m3"] = _xavier_normal(keys[5], HIDDEN_DIM, RANK)
    p["b_m3"] = jnp.zeros((1, RANK), jnp.float32)
    p["w_inv"] = _xavier_normal(keys[6], RANK, PARAM_DIM)
    p["b_inv"] = jnp.zeros((1, PARAM_DIM), jnp.float32)
    return p


WEIGHT_ORDER = [
    "ln_in_w", "ln_in_b",
    "w_t1", "b_t1",
    "w_A", "w_B", "b_fused",
    "ln1_w", "ln1_b",
    "w_m2", "b_m2", "ln2_w", "ln2_b",
    "w_out", "b_out",
]


def prepare_kernel_params(p):
    """Host-side algebraic fusion + bf16 cast of MXU weights.

    w_A = w_lr @ w_m1[:rank], w_B = w_t2 @ w_m1[rank:],
    b_fused = b_lr@w_m1[:rank] + b_t2@w_m1[rank:] + b_m1,
    w_out = w_m3 @ w_inv, b_out = b_m3 @ w_inv + b_inv.
    Note: the fused products are formed in f32 then rounded once to bf16, which
    rounds differently than two sequential bf16 matmuls (documented, within tol).
    Biases / LayerNorm affine params stay in f32 (added after f32 accumulation).
    """
    w_m1a, w_m1b = p["w_m1"][:RANK], p["w_m1"][RANK:]
    kp = {}
    for k in ["ln_in_w", "ln_in_b", "w_t1", "b_t1",
              "ln1_w", "ln1_b", "b_m2", "ln2_w", "ln2_b"]:
        kp[k] = p[k].astype(jnp.float32)
    kp["w_A"] = (p["w_lr"] @ w_m1a).astype(jnp.bfloat16)                   # (256,128)
    kp["w_B"] = (p["w_t2"] @ w_m1b).astype(jnp.bfloat16)                   # (32,128)
    kp["b_fused"] = (p["b_lr"] @ w_m1a + p["b_t2"] @ w_m1b + p["b_m1"]
                     ).astype(jnp.float32)
    kp["w_m2"] = p["w_m2"].astype(jnp.bfloat16)
    kp["w_out"] = (p["w_m3"] @ p["w_inv"]).astype(jnp.bfloat16)            # (128,256)
    kp["b_out"] = (p["b_m3"] @ p["w_inv"] + p["b_inv"]).astype(jnp.float32)
    return kp


# --------------------------------- wrappers --------------------------------------
def _round_up(x, m):
    return ((x + m - 1) // m) * m


def _pick_tile(B, block_rows):
    if block_rows is not None:
        return max(8, _round_up(int(block_rows), 8))
    # At least 2 grid steps when B allows (so both v7x TensorCores get work),
    # capped at 1024 rows/tile.  (For tiles >2048 on v7x, set vmem_limit_bytes.)
    half = _round_up(-(-B // 2), 8)
    return max(8, min(1024, half))


def _prep_t(t, B):
    """Replicate the PyTorch forward's t-shape normalization to (B, 1)."""
    t = jnp.asarray(t, jnp.float32)
    if t.ndim == 0:
        return jnp.broadcast_to(t.reshape(1, 1), (B, 1))
    if t.ndim == 1:
        if t.shape[0] == B:
            return t.reshape(B, 1)
        if t.shape[0] == 1:
            return jnp.broadcast_to(t.reshape(1, 1), (B, 1))
        raise ValueError(f"Unexpected shape for t: {t.shape}, expected ({B}, 1)")
    if t.ndim == 2:
        if t.shape == (1, 1):
            return jnp.broadcast_to(t, (B, 1))
        if t.shape == (B, 1):
            return t
    raise ValueError(f"Unexpected shape for t: {t.shape}, expected ({B}, 1)")


def _prep_z(z):
    if z.ndim == 1:
        z = z[None, :]
    if z.dtype not in (jnp.float32, jnp.bfloat16):
        z = z.astype(jnp.float32)
    return z  # bf16 passes through unchanged (halves HBM read traffic)


def _weight_specs(pvals):
    return [pl.BlockSpec(w.shape, lambda i: (0, 0)) for w in pvals]


@functools.partial(jax.jit, static_argnames=("block_rows", "out_dtype"))
def flow_matching_forward(z, t, kernel_params, block_rows=None, out_dtype=jnp.float32):
    z = _prep_z(z)
    B = z.shape[0]
    t = _prep_t(t, B)

    tb = _pick_tile(B, block_rows)
    B_pad = _round_up(B, tb)
    if B_pad != B:
        z = jnp.pad(z, ((0, B_pad - B), (0, 0)))
        t = jnp.pad(t, ((0, B_pad - B), (0, 0)))

    pvals = [kernel_params[k] for k in WEIGHT_ORDER]
    out = pl.pallas_call(
        flow_matching_fwd_kernel,
        out_shape=jax.ShapeDtypeStruct((B_pad, PARAM_DIM), out_dtype),
        grid=(B_pad // tb,),
        in_specs=[pl.BlockSpec((tb, PARAM_DIM), lambda i: (i, 0)),
                  pl.BlockSpec((tb, 1), lambda i: (i, 0))] + _weight_specs(pvals),
        out_specs=pl.BlockSpec((tb, PARAM_DIM), lambda i: (i, 0)),
        compiler_params=pltpu.CompilerParams(
            dimension_semantics=("parallel",)),
    )(z, t, *pvals)
    return out[:B]


@functools.partial(jax.jit, static_argnames=("num_steps", "clamp_val", "block_rows"))
def flow_matching_generate(z0, kernel_params, num_steps=100, clamp_val=20.0,
                           block_rows=None):
    """Euler ODE sampling (FlowMatchingModel.generate) with the whole time loop
    inside one pallas_call; returns the final z."""
    z = _prep_z(z0)
    B = z.shape[0]
    tb = _pick_tile(B, block_rows)
    B_pad = _round_up(B, tb)
    if B_pad != B:
        z = jnp.pad(z, ((0, B_pad - B), (0, 0)))

    pvals = [kernel_params[k] for k in WEIGHT_ORDER]
    kern = functools.partial(flow_matching_generate_kernel,
                             num_steps=int(num_steps), clamp_val=float(clamp_val))
    out = pl.pallas_call(
        kern,
        out_shape=jax.ShapeDtypeStruct((B_pad, PARAM_DIM), jnp.float32),
        grid=(B_pad // tb,),
        in_specs=[pl.BlockSpec((tb, PARAM_DIM), lambda i: (i, 0))] + _weight_specs(pvals),
        out_specs=pl.BlockSpec((tb, PARAM_DIM), lambda i: (i, 0)),
        scratch_shapes=[pltpu.VMEM((tb, PARAM_DIM), jnp.float32)],
        compiler_params=pltpu.CompilerParams(
            dimension_semantics=("parallel",)),
    )(z, *pvals)
    return out[:B]


# ------------------------------ pure-JAX references -------------------------------
def flow_matching_ref(z, t, p):
    def ln(x, w, b):
        mu = x.mean(-1, keepdims=True)
        var = ((x - mu) ** 2).mean(-1, keepdims=True)
        return (x - mu) / jnp.sqrt(var + LN_EPS) * w + b

    z_norm = ln(z, p["ln_in_w"], p["ln_in_b"])
    z_proj = z_norm @ p["w_lr"] + p["b_lr"]
    h_t = jax.nn.silu(t @ p["w_t1"] + p["b_t1"])
    t_emb = h_t @ p["w_t2"] + p["b_t2"]
    x = jnp.concatenate([z_proj, t_emb], axis=-1)
    h1 = jax.nn.gelu(ln(x @ p["w_m1"] + p["b_m1"], p["ln1_w"], p["ln1_b"]),
                     approximate=False)
    h2 = jax.nn.gelu(ln(h1 @ p["w_m2"] + p["b_m2"], p["ln2_w"], p["ln2_b"]),
                     approximate=False)
    h3 = h2 @ p["w_m3"] + p["b_m3"]
    return h3 @ p["w_inv"] + p["b_inv"]


def generate_ref(z0, p, num_steps, clamp_val=20.0):
    z = z0
    dt = 1.0 / num_steps
    for step in range(num_steps):
        t_val = 1.0 - step / num_steps
        t = jnp.full((z.shape[0], 1), t_val, jnp.float32)
        pred = flow_matching_ref(z, t, p)
        z = jnp.clip(z + pred * dt, -clamp_val, clamp_val)
        z = jnp.where(jnp.isnan(z), 0.0, z)
    return z


# ----------------------------------- main ----------------------------------------
if __name__ == "__main__":
    key = jax.random.PRNGKey(0)
    k_param, k_z, k_t = jax.random.split(key, 3)

    params = init_params(k_param)
    kparams = prepare_kernel_params(params)

    # 1) single-tile forward pass
    B = 8
    z = jax.random.normal(k_z, (B, PARAM_DIM), jnp.float32)
    t = jax.random.uniform(k_t, (B, 1), jnp.float32)
    out = jax.block_until_ready(flow_matching_forward(z, t, kparams))
    ref = flow_matching_ref(z, t, params)
    np.testing.assert_allclose(np.asarray(out), np.asarray(ref), rtol=5e-2, atol=2e-5)

    # 2) multi-tile grid + batch padding + 1-D t broadcasting path
    B2 = 40
    z2 = jax.random.normal(jax.random.PRNGKey(1), (B2, PARAM_DIM), jnp.float32)
    t2 = jax.random.uniform(jax.random.PRNGKey(2), (B2,), jnp.float32)
    out2 = jax.block_until_ready(flow_matching_forward(z2, t2, kparams, block_rows=16))
    ref2 = flow_matching_ref(z2, t2.reshape(-1, 1), params)
    np.testing.assert_allclose(np.asarray(out2), np.asarray(ref2), rtol=5e-2, atol=2e-5)

    # 3) bf16 activations at the HBM boundary (halved z/out traffic)
    out3 = flow_matching_forward(z.astype(jnp.bfloat16), t, kparams,
                                 out_dtype=jnp.bfloat16)
    out3 = jax.block_until_ready(out3).astype(jnp.float32)
    np.testing.assert_allclose(np.asarray(out3), np.asarray(ref), rtol=5e-2, atol=1e-4)

    # 4) in-kernel ODE sampling loop (weights + state VMEM-resident across steps)
    B3, STEPS = 16, 8
    z0 = jax.random.normal(jax.random.PRNGKey(3), (B3, PARAM_DIM), jnp.float32)
    zT = jax.block_until_ready(flow_matching_generate(z0, kparams, num_steps=STEPS))
    zT_ref = generate_ref(z0, params, num_steps=STEPS)
    np.testing.assert_allclose(np.asarray(zT), np.asarray(zT_ref), rtol=1e-2, atol=1e-4)

    print("KERNEL_OK")
</pallas_src>

<mosaic_0001>
module attributes {stable_mosaic.version = 11 : i64} {
  func.func @flow_matching_fwd_kernel(%arg0: i32, %arg1: memref<8x256xf32, #tpu.memory_space<vmem>>, %arg2: memref<8x1xf32, #tpu.memory_space<vmem>>, %arg3: memref<1x256xf32, #tpu.memory_space<vmem>>, %arg4: memref<1x256xf32, #tpu.memory_space<vmem>>, %arg5: memref<1x32xf32, #tpu.memory_space<vmem>>, %arg6: memref<1x32xf32, #tpu.memory_space<vmem>>, %arg7: memref<256x128xbf16, #tpu.memory_space<vmem>>, %arg8: memref<32x128xbf16, #tpu.memory_space<vmem>>, %arg9: memref<1x128xf32, #tpu.memory_space<vmem>>, %arg10: memref<1x128xf32, #tpu.memory_space<vmem>>, %arg11: memref<1x128xf32, #tpu.memory_space<vmem>>, %arg12: memref<128x128xbf16, #tpu.memory_space<vmem>>, %arg13: memref<1x128xf32, #tpu.memory_space<vmem>>, %arg14: memref<1x128xf32, #tpu.memory_space<vmem>>, %arg15: memref<1x128xf32, #tpu.memory_space<vmem>>, %arg16: memref<128x256xbf16, #tpu.memory_space<vmem>>, %arg17: memref<1x256xf32, #tpu.memory_space<vmem>>, %arg18: memref<8x256xf32, #tpu.memory_space<vmem>>) attributes {dimension_semantics = [#tpu.dimension_semantics<parallel>], iteration_bounds = array<i64: 1>, scalar_prefetch = 0 : i64, scratch_operands = 0 : i64, tpu.core_type = #tpu.core_type<tc>, window_params = [{transform_indices = @transform_0, window_bounds = array<i64: 8, 256>}, {transform_indices = @transform_1, window_bounds = array<i64: 8, 1>}, {pipeline_mode = #tpu.pipeline_mode<synchronous>, transform_indices = @transform_2, window_bounds = array<i64: 1, 256>}, {pipeline_mode = #tpu.pipeline_mode<synchronous>, transform_indices = @transform_3, window_bounds = array<i64: 1, 256>}, {pipeline_mode = #tpu.pipeline_mode<synchronous>, transform_indices = @transform_4, window_bounds = array<i64: 1, 32>}, {pipeline_mode = #tpu.pipeline_mode<synchronous>, transform_indices = @transform_5, window_bounds = array<i64: 1, 32>}, {pipeline_mode = #tpu.pipeline_mode<synchronous>, transform_indices = @transform_6, window_bounds = array<i64: 256, 128>}, {pipeline_mode = #tpu.pipeline_mode<synchronous>, transform_indices = @transform_7, window_bounds = array<i64: 32, 128>}, {pipeline_mode = #tpu.pipeline_mode<synchronous>, transform_indices = @transform_8, window_bounds = array<i64: 1, 128>}, {pipeline_mode = #tpu.pipeline_mode<synchronous>, transform_indices = @transform_9, window_bounds = array<i64: 1, 128>}, {pipeline_mode = #tpu.pipeline_mode<synchronous>, transform_indices = @transform_10, window_bounds = array<i64: 1, 128>}, {pipeline_mode = #tpu.pipeline_mode<synchronous>, transform_indices = @transform_11, window_bounds = array<i64: 128, 128>}, {pipeline_mode = #tpu.pipeline_mode<synchronous>, transform_indices = @transform_12, window_bounds = array<i64: 1, 128>}, {pipeline_mode = #tpu.pipeline_mode<synchronous>, transform_indices = @transform_13, window_bounds = array<i64: 1, 128>}, {pipeline_mode = #tpu.pipeline_mode<synchronous>, transform_indices = @transform_14, window_bounds = array<i64: 1, 128>}, {pipeline_mode = #tpu.pipeline_mode<synchronous>, transform_indices = @transform_15, window_bounds = array<i64: 128, 256>}, {pipeline_mode = #tpu.pipeline_mode<synchronous>, transform_indices = @transform_16, window_bounds = array<i64: 1, 256>}, {transform_indices = @transform_17, window_bounds = array<i64: 8, 256>}]} {
    %c0 = arith.constant 0 : index
    %c0_0 = arith.constant 0 : index
    %0 = vector.load %arg1[%c0, %c0_0] : memref<8x256xf32, #tpu.memory_space<vmem>>, vector<8x256xf32>
    %c0_1 = arith.constant 0 : index
    %c0_2 = arith.constant 0 : index
    %1 = vector.load %arg2[%c0_1, %c0_2] : memref<8x1xf32, #tpu.memory_space<vmem>>, vector<8x1xf32>
    %c0_3 = arith.constant 0 : index
    %c0_4 = arith.constant 0 : index
    %2 = vector.load %arg5[%c0_3, %c0_4] : memref<1x32xf32, #tpu.memory_space<vmem>>, vector<1x32xf32>
    %3 = vector.broadcast %1 : vector<8x1xf32> to vector<8x32xf32>
    %4 = vector.broadcast %2 : vector<1x32xf32> to vector<8x32xf32>
    %5 = arith.mulf %3, %4 : vector<8x32xf32>
    %c0_5 = arith.constant 0 : index
    %c0_6 = arith.constant 0 : index
    %6 = vector.load %arg6[%c0_5, %c0_6] : memref<1x32xf32, #tpu.memory_space<vmem>>, vector<1x32xf32>
    %7 = vector.broadcast %6 : vector<1x32xf32> to vector<8x32xf32>
    %8 = arith.addf %5, %7 : vector<8x32xf32>
    %cst = arith.constant 0.000000e+00 : f32
    %9 = vector.broadcast %cst : f32 to vector<8x32xf32>
    %10 = arith.subf %9, %8 : vector<8x32xf32>
    %11 = math.exp %10 : vector<8x32xf32>
    %cst_7 = arith.constant 1.000000e+00 : f32
    %12 = vector.broadcast %cst_7 : f32 to vector<8x32xf32>
    %13 = arith.addf %12, %11 : vector<8x32xf32>
    %14 = arith.divf %8, %13 : vector<8x32xf32>
    %15 = arith.truncf %14 : vector<8x32xf32> to vector<8x32xbf16>
    %c0_8 = arith.constant 0 : index
    %c0_9 = arith.constant 0 : index
    %16 = vector.load %arg8[%c0_8, %c0_9] : memref<32x128xbf16, #tpu.memory_space<vmem>>, vector<32x128xbf16>
    %cst_10 = arith.constant dense<0.000000e+00> : vector<8x128xf32>
    %17 = tpu.matmul %15, %16, %cst_10 {dimension_numbers = #tpu.dot_dimension_numbers<[1], [0], [0], [1], [0, 0, 1, 1], [], []>} : vector<8x32xbf16>, vector<32x128xbf16>, vector<8x128xf32> -> vector<8x128xf32>
    %c0_11 = arith.constant 0 : index
    %c0_12 = arith.constant 0 : index
    %18 = vector.load %arg3[%c0_11, %c0_12] : memref<1x256xf32, #tpu.memory_space<vmem>>, vector<1x256xf32>
    %c0_13 = arith.constant 0 : index
    %c0_14 = arith.constant 0 : index
    %19 = vector.load %arg4[%c0_13, %c0_14] : memref<1x256xf32, #tpu.memory_space<vmem>>, vector<1x256xf32>
    %c0_15 = arith.constant 0 : index
    %c0_16 = arith.constant 0 : index
    %20 = vector.load %arg7[%c0_15, %c0_16] : memref<256x128xbf16, #tpu.memory_space<vmem>>, vector<256x128xbf16>
    %c0_17 = arith.constant 0 : index
    %c0_18 = arith.constant 0 : index
    %21 = vector.load %arg9[%c0_17, %c0_18] : memref<1x128xf32, #tpu.memory_space<vmem>>, vector<1x128xf32>
    %c0_19 = arith.constant 0 : index
    %c0_20 = arith.constant 0 : index
    %22 = vector.load %arg10[%c0_19, %c0_20] : memref<1x128xf32, #tpu.memory_space<vmem>>, vector<1x128xf32>
    %c0_21 = arith.constant 0 : index
    %c0_22 = arith.constant 0 : index
    %23 = vector.load %arg11[%c0_21, %c0_22] : memref<1x128xf32, #tpu.memory_space<vmem>>, vector<1x128xf32>
    %c0_23 = arith.constant 0 : index
    %c0_24 = arith.constant 0 : index
    %24 = vector.load %arg12[%c0_23, %c0_24] : memref<128x128xbf16, #tpu.memory_space<vmem>>, vector<128x128xbf16>
    %c0_25 = arith.constant 0 : index
    %c0_26 = arith.constant 0 : index
    %25 = vector.load %arg13[%c0_25, %c0_26] : memref<1x128xf32, #tpu.memory_space<vmem>>, vector<1x128xf32>
    %c0_27 = arith.constant 0 : index
    %c0_28 = arith.constant 0 : index
    %26 = vector.load %arg14[%c0_27, %c0_28] : memref<1x128xf32, #tpu.memory_space<vmem>>, vector<1x128xf32>
    %c0_29 = arith.constant 0 : index
    %c0_30 = arith.constant 0 : index
    %27 = vector.load %arg15[%c0_29, %c0_30] : memref<1x128xf32, #tpu.memory_space<vmem>>, vector<1x128xf32>
    %c0_31 = arith.constant 0 : index
    %c0_32 = arith.constant 0 : index
    %28 = vector.load %arg16[%c0_31, %c0_32] : memref<128x256xbf16, #tpu.memory_space<vmem>>, vector<128x256xbf16>
    %c0_33 = arith.constant 0 : index
    %c0_34 = arith.constant 0 : index
    %29 = vector.load %arg17[%c0_33, %c0_34] : memref<1x256xf32, #tpu.memory_space<vmem>>, vector<1x256xf32>
    %cst_35 = arith.constant dense<0.000000e+00> : vector<8xf32>
    %30 = vector.multi_reduction <add>, %0, %cst_35 [1] : vector<8x256xf32> to vector<8xf32>
    %31 = vector.shape_cast %30 : vector<8xf32> to vector<8x1xf32>
    %cst_36 = arith.constant 2.560000e+02 : f32
    %32 = vector.broadcast %cst_36 : f32 to vector<8x1xf32>
    %33 = arith.divf %31, %32 : vector<8x1xf32>
    %34 = vector.broadcast %33 : vector<8x1xf32> to vector<8x256xf32>
    %35 = arith.subf %0, %34 : vector<8x256xf32>
    %36 = arith.mulf %35, %35 : vector<8x256xf32>
    %cst_37 = arith.constant dense<0.000000e+00> : vector<8xf32>
    %37 = vector.multi_reduction <add>, %36, %cst_37 [1] : vector<8x256xf32> to vector<8xf32>
    %38 = vector.shape_cast %37 : vector<8xf32> to vector<8x1xf32>
    %cst_38 = arith.constant 2.560000e+02 : f32
    %39 = vector.broadcast %cst_38 : f32 to vector<8x1xf32>
    %40 = arith.divf %38, %39 : vector<8x1xf32>
    %cst_39 = arith.constant 9.99999974E-6 : f32
    %41 = vector.broadcast %cst_39 : f32 to vector<8x1xf32>
    %42 = arith.addf %40, %41 : vector<8x1xf32>
    %43 = math.rsqrt %42 : vector<8x1xf32>
    %44 = vector.broadcast %43 : vector<8x1xf32> to vector<8x256xf32>
    %45 = arith.mulf %35, %44 : vector<8x256xf32>
    %46 = vector.broadcast %18 : vector<1x256xf32> to vector<8x256xf32>
    %47 = arith.mulf %45, %46 : vector<8x256xf32>
    %48 = vector.broadcast %19 : vector<1x256xf32> to vector<8x256xf32>
    %49 = arith.addf %47, %48 : vector<8x256xf32>
    %50 = arith.truncf %49 : vector<8x256xf32> to vector<8x256xbf16>
    %cst_40 = arith.constant dense<0.000000e+00> : vector<8x128xf32>
    %51 = tpu.matmul %50, %20, %cst_40 {dimension_numbers = #tpu.dot_dimension_numbers<[1], [0], [0], [1], [0, 0, 1, 1], [], []>} : vector<8x256xbf16>, vector<256x128xbf16>, vector<8x128xf32> -> vector<8x128xf32>
    %52 = arith.addf %51, %17 : vector<8x128xf32>
    %53 = vector.broadcast %21 : vector<1x128xf32> to vector<8x128xf32>
    %54 = arith.addf %52, %53 : vector<8x128xf32>
    %cst_41 = arith.constant dense<0.000000e+00> : vector<8xf32>
    %55 = vector.multi_reduction <add>, %54, %cst_41 [1] : vector<8x128xf32> to vector<8xf32>
    %56 = vector.shape_cast %55 : vector<8xf32> to vector<8x1xf32>
    %cst_42 = arith.constant 1.280000e+02 : f32
    %57 = vector.broadcast %cst_42 : f32 to vector<8x1xf32>
    %58 = arith.divf %56, %57 : vector<8x1xf32>
    %59 = vector.broadcast %58 : vector<8x1xf32> to vector<8x128xf32>
    %60 = arith.subf %54, %59 : vector<8x128xf32>
    %61 = arith.mulf %60, %60 : vector<8x128xf32>
    %cst_43 = arith.constant dense<0.000000e+00> : vector<8xf32>
    %62 = vector.multi_reduction <add>, %61, %cst_43 [1] : vector<8x128xf32> to vector<8xf32>
    %63 = vector.shape_cast %62 : vector<8xf32> to vector<8x1xf32>
    %cst_44 = arith.constant 1.280000e+02 : f32
    %64 = vector.broadcast %cst_44 : f32 to vector<8x1xf32>
    %65 = arith.divf %63, %64 : vector<8x1xf32>
    %cst_45 = arith.constant 9.99999974E-6 : f32
    %66 = vector.broadcast %cst_45 : f32 to vector<8x1xf32>
    %67 = arith.addf %65, %66 : vector<8x1xf32>
    %68 = math.rsqrt %67 : vector<8x1xf32>
    %69 = vector.broadcast %68 : vector<8x1xf32> to vector<8x128xf32>
    %70 = arith.mulf %60, %69 : vector<8x128xf32>
    %71 = vector.broadcast %22 : vector<1x128xf32> to vector<8x128xf32>
    %72 = arith.mulf %70, %71 : vector<8x128xf32>
    %73 = vector.broadcast %23 : vector<1x128xf32> to vector<8x128xf32>
    %74 = arith.addf %72, %73 : vector<8x128xf32>
    %cst_46 = arith.constant 5.000000e-01 : f32
    %75 = vector.broadcast %cst_46 : f32 to vector<8x128xf32>
    %76 = arith.mulf %75, %74 : vector<8x128xf32>
    %cst_47 = arith.constant 0.707106769 : f32
    %77 = vector.broadcast %cst_47 : f32 to vector<8x128xf32>
    %78 = arith.mulf %74, %77 : vector<8x128xf32>
    %79 = math.erf %78 : vector<8x128xf32>
    %cst_48 = arith.constant 1.000000e+00 : f32
    %80 = vector.broadcast %cst_48 : f32 to vector<8x128xf32>
    %81 = arith.addf %80, %79 : vector<8x128xf32>
    %82 = arith.mulf %76, %81 : vector<8x128xf32>
    %83 = arith.truncf %82 : vector<8x128xf32> to vector<8x128xbf16>
    %cst_49 = arith.constant dense<0.000000e+00> : vector<8x128xf32>
    %84 = tpu.matmul %83, %24, %cst_49 {dimension_numbers = #tpu.dot_dimension_numbers<[1], [0], [0], [1], [0, 0, 1, 1], [], []>} : vector<8x128xbf16>, vector<128x128xbf16>, vector<8x128xf32> -> vector<8x128xf32>
    %85 = vector.broadcast %25 : vector<1x128xf32> to vector<8x128xf32>
    %86 = arith.addf %84, %85 : vector<8x128xf32>
    %cst_50 = arith.constant dense<0.000000e+00> : vector<8xf32>
    %87 = vector.multi_reduction <add>, %86, %cst_50 [1] : vector<8x128xf32> to vector<8xf32>
    %88 = vector.shape_cast %87 : vector<8xf32> to vector<8x1xf32>
    %cst_51 = arith.constant 1.280000e+02 : f32
    %89 = vector.broadcast %cst_51 : f32 to vector<8x1xf32>
    %90 = arith.divf %88, %89 : vector<8x1xf32>
    %91 = vector.broadcast %90 : vector<8x1xf32> to vector<8x128xf32>
    %92 = arith.subf %86, %91 : vector<8x128xf32>
    %93 = arith.mulf %92, %92 : vector<8x128xf32>
    %cst_52 = arith.constant dense<0.000000e+00> : vector<8xf32>
    %94 = vector.multi_reduction <add>, %93, %cst_52 [1] : vector<8x128xf32> to vector<8xf32>
    %95 = vector.shape_cast %94 : vector<8xf32> to vector<8x1xf32>
    %cst_53 = arith.constant 1.280000e+02 : f32
    %96 = vector.broadcast %cst_53 : f32 to vector<8x1xf32>
    %97 = arith.divf %95, %96 : vector<8x1xf32>
    %cst_54 = arith.constant 9.99999974E-6 : f32
    %98 = vector.broadcast %cst_54 : f32 to vector<8x1xf32>
    %99 = arith.addf %97, %98 : vector<8x1xf32>
    %100 = math.rsqrt %99 : vector<8x1xf32>
    %101 = vector.broadcast %100 : vector<8x1xf32> to vector<8x128xf32>
    %102 = arith.mulf %92, %101 : vector<8x128xf32>
    %103 = vector.broadcast %26 : vector<1x128xf32> to vector<8x128xf32>
    %104 = arith.mulf %102, %103 : vector<8x128xf32>
    %105 = vector.broadcast %27 : vector<1x128xf32> to vector<8x128xf32>
    %106 = arith.addf %104, %105 : vector<8x128xf32>
    %cst_55 = arith.constant 5.000000e-01 : f32
    %107 = vector.broadcast %cst_55 : f32 to vector<8x128xf32>
    %108 = arith.mulf %107, %106 : vector<8x128xf32>
    %cst_56 = arith.constant 0.707106769 : f32
    %109 = vector.broadcast %cst_56 : f32 to vector<8x128xf32>
    %110 = arith.mulf %106, %109 : vector<8x128xf32>
    %111 = math.erf %110 : vector<8x128xf32>
    %cst_57 = arith.constant 1.000000e+00 : f32
    %112 = vector.broadcast %cst_57 : f32 to vector<8x128xf32>
    %113 = arith.addf %112, %111 : vector<8x128xf32>
    %114 = arith.mulf %108, %113 : vector<8x128xf32>
    %115 = arith.truncf %114 : vector<8x128xf32> to vector<8x128xbf16>
    %cst_58 = arith.constant dense<0.000000e+00> : vector<8x256xf32>
    %116 = tpu.matmul %115, %28, %cst_58 {dimension_numbers = #tpu.dot_dimension_numbers<[1], [0], [0], [1], [0, 0, 1, 1], [], []>} : vector<8x128xbf16>, vector<128x256xbf16>, vector<8x256xf32> -> vector<8x256xf32>
    %117 = vector.broadcast %29 : vector<1x256xf32> to vector<8x256xf32>
    %118 = arith.addf %116, %117 : vector<8x256xf32>
    %c0_59 = arith.constant 0 : index
    %c0_60 = arith.constant 0 : index
    %119 = vector.load %arg18[%c0_59, %c0_60] : memref<8x256xf32, #tpu.memory_space<vmem>>, vector<8x256xf32>
    tpu.vector_store %arg18[%c0_59, %c0_60], %118 {strides = array<i32>} : memref<8x256xf32, #tpu.memory_space<vmem>>, vector<8x256xf32>,
    return
  }
  func.func @transform_0(%arg0: i32) -> (i32, i32) {
    %c0_i32 = arith.constant 0 : i32
    %c0_i32_0 = arith.constant 0 : i32
    return %arg0, %c0_i32 : i32, i32
  }
  func.func @transform_1(%arg0: i32) -> (i32, i32) {
    %c0_i32 = arith.constant 0 : i32
    %c0_i32_0 = arith.constant 0 : i32
    return %arg0, %c0_i32 : i32, i32
  }
  func.func @transform_2(%arg0: i32) -> (i32, i32) {
    %c0_i32 = arith.constant 0 : i32
    %c0_i32_0 = arith.constant 0 : i32
    %c0_i32_1 = arith.constant 0 : i32
    return %c0_i32, %c0_i32_0 : i32, i32
  }
  func.func @transform_3(%arg0: i32) -> (i32, i32) {
    %c0_i32 = arith.constant 0 : i32
    %c0_i32_0 = arith.constant 0 : i32
    %c0_i32_1 = arith.constant 0 : i32
    return %c0_i32, %c0_i32_0 : i32, i32
  }
  func.func @transform_4(%arg0: i32) -> (i32, i32) {
    %c0_i32 = arith.constant 0 : i32
    %c0_i32_0 = arith.constant 0 : i32
    %c0_i32_1 = arith.constant 0 : i32
    return %c0_i32, %c0_i32_0 : i32, i32
  }
  func.func @transform_5(%arg0: i32) -> (i32, i32) {
    %c0_i32 = arith.constant 0 : i32
    %c0_i32_0 = arith.constant 0 : i32
    %c0_i32_1 = arith.constant 0 : i32
    return %c0_i32, %c0_i32_0 : i32, i32
  }
  func.func @transform_6(%arg0: i32) -> (i32, i32) {
    %c0_i32 = arith.constant 0 : i32
    %c0_i32_0 = arith.constant 0 : i32
    %c0_i32_1 = arith.constant 0 : i32
    return %c0_i32, %c0_i32_0 : i32, i32
  }
  func.func @transform_7(%arg0: i32) -> (i32, i32) {
    %c0_i32 = arith.constant 0 : i32
    %c0_i32_0 = arith.constant 0 : i32
    %c0_i32_1 = arith.constant 0 : i32
    return %c0_i32, %c0_i32_0 : i32, i32
  }
  func.func @transform_8(%arg0: i32) -> (i32, i32) {
    %c0_i32 = arith.constant 0 : i32
    %c0_i32_0 = arith.constant 0 : i32
    %c0_i32_1 = arith.constant 0 : i32
    return %c0_i32, %c0_i32_0 : i32, i32
  }
  func.func @transform_9(%arg0: i32) -> (i32, i32) {
    %c0_i32 = arith.constant 0 : i32
    %c0_i32_0 = arith.constant 0 : i32
    %c0_i32_1 = arith.constant 0 : i32
    return %c0_i32, %c0_i32_0 : i32, i32
  }
  func.func @transform_10(%arg0: i32) -> (i32, i32) {
    %c0_i32 = arith.constant 0 : i32
    %c0_i32_0 = arith.constant 0 : i32
    %c0_i32_1 = arith.constant 0 : i32
    return %c0_i32, %c0_i32_0 : i32, i32
  }
  func.func @transform_11(%arg0: i32) -> (i32, i32) {
    %c0_i32 = arith.constant 0 : i32
    %c0_i32_0 = arith.constant 0 : i32
    %c0_i32_1 = arith.constant 0 : i32
    return %c0_i32, %c0_i32_0 : i32, i32
  }
  func.func @transform_12(%arg0: i32) -> (i32, i32) {
    %c0_i32 = arith.constant 0 : i32
    %c0_i32_0 = arith.constant 0 : i32
    %c0_i32_1 = arith.constant 0 : i32
    return %c0_i32, %c0_i32_0 : i32, i32
  }
  func.func @transform_13(%arg0: i32) -> (i32, i32) {
    %c0_i32 = arith.constant 0 : i32
    %c0_i32_0 = arith.constant 0 : i32
    %c0_i32_1 = arith.constant 0 : i32
    return %c0_i32, %c0_i32_0 : i32, i32
  }
  func.func @transform_14(%arg0: i32) -> (i32, i32) {
    %c0_i32 = arith.constant 0 : i32
    %c0_i32_0 = arith.constant 0 : i32
    %c0_i32_1 = arith.constant 0 : i32
    return %c0_i32, %c0_i32_0 : i32, i32
  }
  func.func @transform_15(%arg0: i32) -> (i32, i32) {
    %c0_i32 = arith.constant 0 : i32
    %c0_i32_0 = arith.constant 0 : i32
    %c0_i32_1 = arith.constant 0 : i32
    return %c0_i32, %c0_i32_0 : i32, i32
  }
  func.func @transform_16(%arg0: i32) -> (i32, i32) {
    %c0_i32 = arith.constant 0 : i32
    %c0_i32_0 = arith.constant 0 : i32
    %c0_i32_1 = arith.constant 0 : i32
    return %c0_i32, %c0_i32_0 : i32, i32
  }
  func.func @transform_17(%arg0: i32) -> (i32, i32) {
    %c0_i32 = arith.constant 0 : i32
    %c0_i32_0 = arith.constant 0 : i32
    return %arg0, %c0_i32 : i32, i32
  }
}

</mosaic_0001>

<llo_original>
// kernel: flow_matching_forward.1
$region0: #{flow_matching_forward.1}
  #allocation0 [shape = 'u32[]', space=smem, size = 0x4, offset = 0x4, fixed_abs, tag = 'smem constant byte address 0x4 - core index']
  #allocation1 [shape = 'u32[72,128]{1,0:T(1,128)}', space=vmem, size = 0x9000, scoped, tag = 'internal scratch']
  %s0 = inlined_call_operand.hbm [shape: f32[8,256], index: 0, kind: input, shape index: {}]
  %s1 = inlined_call_operand.vmem [shape: f32[8,1], index: 1, kind: input, shape index: {}]
  %s2 = inlined_call_operand.vmem [shape: f32[1,256], index: 2, kind: input, shape index: {}]
  %s3 = inlined_call_operand.vmem [shape: f32[1,256], index: 3, kind: input, shape index: {}]
  %s4 = inlined_call_operand.vmem [shape: f32[1,32], index: 4, kind: input, shape index: {}]
  %s5 = inlined_call_operand.hbm [shape: f32[1,32], index: 5, kind: input, shape index: {}]
  %s6 = inlined_call_operand.hbm [shape: bf16[256,128], index: 6, kind: input, shape index: {}]
  %s7 = inlined_call_operand.vmem [shape: bf16[32,128], index: 7, kind: input, shape index: {}]
  %s8 = inlined_call_operand.hbm [shape: f32[1,128], index: 8, kind: input, shape index: {}]
  %s9 = inlined_call_operand.hbm [shape: f32[1,128], index: 9, kind: input, shape index: {}]
  %s10 = inlined_call_operand.hbm [shape: f32[1,128], index: 10, kind: input, shape index: {}]
  %s11 = inlined_call_operand.hbm [shape: bf16[128,128], index: 11, kind: input, shape index: {}]
  %s12 = inlined_call_operand.hbm [shape: f32[1,128], index: 12, kind: input, shape index: {}]
  %s13 = inlined_call_operand.hbm [shape: f32[1,128], index: 13, kind: input, shape index: {}]
  %s14 = inlined_call_operand.hbm [shape: f32[1,128], index: 14, kind: input, shape index: {}]
  %s15 = inlined_call_operand.hbm [shape: bf16[128,256], index: 15, kind: input, shape index: {}]
  %s16 = inlined_call_operand.hbm [shape: f32[1,256], index: 16, kind: input, shape index: {}]
  %s17 = inlined_call_operand.hbm [shape: f32[8,256], index: 17, kind: output, shape index: {}]
  %s18 = sld [smem:[#allocation0]]
  $region126: #{flow_matching_forward.1} parent=0
    _
  %s20 = ssub.s32 1, %s18
  %s21 = scalar_select 0, %s20, %s18
  $region1: #{flow_matching_forward.1} parent=0
    #allocation2 [shape = 'u8[8192]{0}', space=vmem, size = 0x2000, scoped, tag = 'input window, operand 0, single buffered']
    #allocation3 [shape = 's32[1]{0}', space=sflag, size = 0x4, scoped, tag = 'scoped memory for flow_matching_forward.1']
    #allocation4 [shape = 's32[1]{0}', space=sflag, size = 0x4, scoped, tag = 'scoped memory for flow_matching_forward.1']
    #allocation5 [shape = 'u8[512]{0}', space=vmem, size = 0x400, scoped, tag = 'input window, operand 5, single buffered']
    #allocation6 [shape = 's32[1]{0}', space=sflag, size = 0x4, scoped, tag = 'scoped memory for flow_matching_forward.1']
    #allocation7 [shape = 'u8[65536]{0}', space=vmem, size = 0x10000, scoped, tag = 'input window, operand 6, single buffered']
    #allocation8 [shape = 'u8[512]{0}', space=vmem, size = 0x400, scoped, tag = 'input window, operand 8, single buffered']
    #allocation9 [shape = 's32[1]{0}', space=sflag, size = 0x4, scoped, tag = 'scoped memory for flow_matching_forward.1']
    #allocation10 [shape = 'u8[512]{0}', space=vmem, size = 0x400, scoped, tag = 'input window, operand 9, single buffered']
    #allocation11 [shape = 'u8[512]{0}', space=vmem, size = 0x400, scoped, tag = 'input window, operand 10, single buffered']
    #allocation12 [shape = 's32[1]{0}', space=sflag, size = 0x4, scoped, tag = 'scoped memory for flow_matching_forward.1']
    #allocation13 [shape = 'u8[32768]{0}', space=vmem, size = 0x8000, scoped, tag = 'input window, operand 11, single buffered']
    #allocation14 [shape = 'u8[512]{0}', space=vmem, size = 0x400, scoped, tag = 'input window, operand 12, single buffered']
    #allocation15 [shape = 's32[1]{0}', space=sflag, size = 0x4, scoped, tag = 'scoped memory for flow_matching_forward.1']
    #allocation16 [shape = 'u8[512]{0}', space=vmem, size = 0x400, scoped, tag = 'input window, operand 13, single buffered']
    #allocation17 [shape = 'u8[512]{0}', space=vmem, size = 0x400, scoped, tag = 'input window, operand 14, single buffered']
    #allocation18 [shape = 's32[1]{0}', space=sflag, size = 0x4, scoped, tag = 'scoped memory for flow_matching_forward.1']
    #allocation19 [shape = 'u8[65536]{0}', space=vmem, size = 0x10000, scoped, tag = 'input window, operand 15, single buffered']
    #allocation20 [shape = 'u8[1024]{0}', space=vmem, size = 0x400, scoped, tag = 'input window, operand 16, single buffered']
    #allocation21 [shape = 's32[1]{0}', space=sflag, size = 0x4, scoped, tag = 'scoped memory for flow_matching_forward.1']
    #allocation22 [shape = 'u8[8192]{0}', space=vmem, size = 0x2000, scoped, tag = 'output window, operand 0, single buffered']
    %22 = vsyncpa [#allocation3], 0
    %23 = vsyncpa [#allocation6], 0
    %24 = vsyncpa [#allocation9], 0
    %25 = vsyncpa [#allocation12], 0
    %26 = vsyncpa [#allocation15], 0
    %27 = vsyncpa [#allocation18], 0
    %28 = vsyncpa [#allocation21], 0
    %29 = vsyncpa [#allocation4], 0
    // Predicated region
    $region2: #{flow_matching_forward.1} parent=1 // pred_check
      _
    $region3: #{flow_matching_forward.1} parent=1 // pred_check_branch
      %31 = sbr.rel (0) target = $region5
    $region4: #{flow_matching_forward.1} parent=1 // pred_region
      %33 = vsyncadd [#allocation3], 0
      %s35 = sshll.u32 %s0, 4
      %s36 = int_to_ptr.hbm [resolvable:$true] %s35
      %s37 = sshll.u32 [#allocation2], 4
      %s38 = int_to_ptr.vmem [resolvable:$true] %s37
      %40 = dma.hbm_to_vmem [thread:$0]  %s36, 256, %s38, [#allocation3]
    $region5: #{flow_matching_forward.1} parent=1 // pred_fallthru
      _
    // Predicated region
    $region6: #{flow_matching_forward.1} parent=1 // pred_check
      _
    $region7: #{flow_matching_forward.1} parent=1 // pred_check_branch
      %42 = sbr.rel (0) target = $region9
    $region8: #{flow_matching_forward.1} parent=1 // pred_region
      _
    $region9: #{flow_matching_forward.1} parent=1 // pred_fallthru
      _
    // Predicated region
    $region10: #{flow_matching_forward.1} parent=1 // pred_check
      _
    $region11: #{flow_matching_forward.1} parent=1 // pred_check_branch
      %44 = sbr.rel (0) target = $region13
    $region12: #{flow_matching_forward.1} parent=1 // pred_region
      _
    $region13: #{flow_matching_forward.1} parent=1 // pred_fallthru
      _
    // Predicated region
    $region14: #{flow_matching_forward.1} parent=1 // pred_check
      _
    $region15: #{flow_matching_forward.1} parent=1 // pred_check_branch
      %46 = sbr.rel (0) target = $region17
    $region16: #{flow_matching_forward.1} parent=1 // pred_region
      _
    $region17: #{flow_matching_forward.1} parent=1 // pred_fallthru
      _
    // Predicated region
    $region18: #{flow_matching_forward.1} parent=1 // pred_check
      _
    $region19: #{flow_matching_forward.1} parent=1 // pred_check_branch
      %48 = sbr.rel (0) target = $region21
    $region20: #{flow_matching_forward.1} parent=1 // pred_region
      _
    $region21: #{flow_matching_forward.1} parent=1 // pred_fallthru
      _
    // Predicated region
    $region22: #{flow_matching_forward.1} parent=1 // pred_check
      _
    $region23: #{flow_matching_forward.1} parent=1 // pred_check_branch
      %50 = sbr.rel (0) target = $region25
    $region24: #{flow_matching_forward.1} parent=1 // pred_region
      %52 = vsyncadd [#allocation6], 0
      %s54 = sshll.u32 %s5, 4
      %s55 = int_to_ptr.hbm [resolvable:$true] %s54
      %s56 = sshll.u32 [#allocation5], 4
      %s57 = int_to_ptr.vmem [resolvable:$true] %s56
      %59 = dma.hbm_to_vmem [thread:$0]  %s55, 16, %s57, [#allocation6]
    $region25: #{flow_matching_forward.1} parent=1 // pred_fallthru
      _
    // Predicated region
    $region26: #{flow_matching_forward.1} parent=1 // pred_check
      _
    $region27: #{flow_matching_forward.1} parent=1 // pred_check_branch
      %61 = sbr.rel (0) target = $region29
    $region28: #{flow_matching_forward.1} parent=1 // pred_region
      %63 = vsyncadd [#allocation6], 0
      %s64 = sshll.u32 %s6, 4
      %s65 = int_to_ptr.hbm [resolvable:$true] %s64
      %s66 = sshll.u32 [#allocation7], 4
      %s67 = int_to_ptr.vmem [resolvable:$true] %s66
      %72 = dma.hbm_to_vmem [thread:$0]  %s65, 2048, %s67, [#allocation6], 64, 64, 4
    $region29: #{flow_matching_forward.1} parent=1 // pred_fallthru
      _
    // Predicated region
    $region30: #{flow_matching_forward.1} parent=1 // pred_check
      _
    $region31: #{flow_matching_forward.1} parent=1 // pred_check_branch
      %74 = sbr.rel (0) target = $region33
    $region32: #{flow_matching_forward.1} parent=1 // pred_region
      _
    $region33: #{flow_matching_forward.1} parent=1 // pred_fallthru
      _
    // Predicated region
    $region34: #{flow_matching_forward.1} parent=1 // pred_check
      _
    $region35: #{flow_matching_forward.1} parent=1 // pred_check_branch
      %76 = sbr.rel (0) target = $region37
    $region36: #{flow_matching_forward.1} parent=1 // pred_region
      %78 = vsyncadd [#allocation9], 0
      %s80 = sshll.u32 %s8, 4
      %s81 = int_to_ptr.hbm [resolvable:$true] %s80
      %s82 = sshll.u32 [#allocation8], 4
      %s83 = int_to_ptr.vmem [resolvable:$true] %s82
      %85 = dma.hbm_to_vmem [thread:$0]  %s81, 16, %s83, [#allocation9]
    $region37: #{flow_matching_forward.1} parent=1 // pred_fallthru
      _
    // Predicated region
    $region38: #{flow_matching_forward.1} parent=1 // pred_check
      _
    $region39: #{flow_matching_forward.1} parent=1 // pred_check_branch
      %87 = sbr.rel (0) target = $region41
    $region40: #{flow_matching_forward.1} parent=1 // pred_region
      %89 = vsyncadd [#allocation9], 0
      %s91 = sshll.u32 %s9, 4
      %s92 = int_to_ptr.hbm [resolvable:$true] %s91
      %s93 = sshll.u32 [#allocation10], 4
      %s94 = int_to_ptr.vmem [resolvable:$true] %s93
      %96 = dma.hbm_to_vmem [thread:$0]  %s92, 16, %s94, [#allocation9]
    $region41: #{flow_matching_forward.1} parent=1 // pred_fallthru
      _
    // Predicated region
    $region42: #{flow_matching_forward.1} parent=1 // pred_check
      _
    $region43: #{flow_matching_forward.1} parent=1 // pred_check_branch
      %98 = sbr.rel (0) target = $region45
    $region44: #{flow_matching_forward.1} parent=1 // pred_region
      %100 = vsyncadd [#allocation12], 0
      %s102 = sshll.u32 %s10, 4
      %s103 = int_to_ptr.hbm [resolvable:$true] %s102
      %s104 = sshll.u32 [#allocation11], 4
      %s105 = int_to_ptr.vmem [resolvable:$true] %s104
      %107 = dma.hbm_to_vmem [thread:$0]  %s103, 16, %s105, [#allocation12]
    $region45: #{flow_matching_forward.1} parent=1 // pred_fallthru
      _
    // Predicated region
    $region46: #{flow_matching_forward.1} parent=1 // pred_check
      _
    $region47: #{flow_matching_forward.1} parent=1 // pred_check_branch
      %109 = sbr.rel (0) target = $region49
    $region48: #{flow_matching_forward.1} parent=1 // pred_region
      %111 = vsyncadd [#allocation12], 0
      %s112 = sshll.u32 %s11, 4
      %s113 = int_to_ptr.hbm [resolvable:$true] %s112
      %s114 = sshll.u32 [#allocation13], 4
      %s115 = int_to_ptr.vmem [resolvable:$true] %s114
      %120 = dma.hbm_to_vmem [thread:$0]  %s113, 1024, %s115, [#allocation12], 64, 64, 4
    $region49: #{flow_matching_forward.1} parent=1 // pred_fallthru
      _
    // Predicated region
    $region50: #{flow_matching_forward.1} parent=1 // pred_check
      _
    $region51: #{flow_matching_forward.1} parent=1 // pred_check_branch
      %122 = sbr.rel (0) target = $region53
    $region52: #{flow_matching_forward.1} parent=1 // pred_region
      %124 = vsyncadd [#allocation15], 0
      %s126 = sshll.u32 %s12, 4
      %s127 = int_to_ptr.hbm [resolvable:$true] %s126
      %s128 = sshll.u32 [#allocation14], 4
      %s129 = int_to_ptr.vmem [resolvable:$true] %s128
      %131 = dma.hbm_to_vmem [thread:$0]  %s127, 16, %s129, [#allocation15]
    $region53: #{flow_matching_forward.1} parent=1 // pred_fallthru
      _
    // Predicated region
    $region54: #{flow_matching_forward.1} parent=1 // pred_check
      _
    $region55: #{flow_matching_forward.1} parent=1 // pred_check_branch
      %133 = sbr.rel (0) target = $region57
    $region56: #{flow_matching_forward.1} parent=1 // pred_region
      %135 = vsyncadd [#allocation15], 0
      %s137 = sshll.u32 %s13, 4
      %s138 = int_to_ptr.hbm [resolvable:$true] %s137
      %s139 = sshll.u32 [#allocation16], 4
      %s140 = int_to_ptr.vmem [resolvable:$true] %s139
      %142 = dma.hbm_to_vmem [thread:$0]  %s138, 16, %s140, [#allocation15]
    $region57: #{flow_matching_forward.1} parent=1 // pred_fallthru
      _
    // Predicated region
    $region58: #{flow_matching_forward.1} parent=1 // pred_check
      _
    $region59: #{flow_matching_forward.1} parent=1 // pred_check_branch
      %144 = sbr.rel (0) target = $region61
    $region60: #{flow_matching_forward.1} parent=1 // pred_region
      %146 = vsyncadd [#allocation18], 0
      %s148 = sshll.u32 %s14, 4
      %s149 = int_to_ptr.hbm [resolvable:$true] %s148
      %s150 = sshll.u32 [#allocation17], 4
      %s151 = int_to_ptr.vmem [resolvable:$true] %s150
      %153 = dma.hbm_to_vmem [thread:$0]  %s149, 16, %s151, [#allocation18]
    $region61: #{flow_matching_forward.1} parent=1 // pred_fallthru
      _
    // Predicated region
    $region62: #{flow_matching_forward.1} parent=1 // pred_check
      _
    $region63: #{flow_matching_forward.1} parent=1 // pred_check_branch
      %155 = sbr.rel (0) target = $region65
    $region64: #{flow_matching_forward.1} parent=1 // pred_region
      %157 = vsyncadd [#allocation18], 0
      %s158 = sshll.u32 %s15, 4
      %s159 = int_to_ptr.hbm [resolvable:$true] %s158
      %s160 = sshll.u32 [#allocation19], 4
      %s161 = int_to_ptr.vmem [resolvable:$true] %s160
      %166 = dma.hbm_to_vmem [thread:$0]  %s159, 2048, %s161, [#allocation18], 128, 128, 8
    $region65: #{flow_matching_forward.1} parent=1 // pred_fallthru
      _
    // Predicated region
    $region66: #{flow_matching_forward.1} parent=1 // pred_check
      _
    $region67: #{flow_matching_forward.1} parent=1 // pred_check_branch
      %168 = sbr.rel (0) target = $region69
    $region68: #{flow_matching_forward.1} parent=1 // pred_region
      %170 = vsyncadd [#allocation21], 0
      %s172 = sshll.u32 %s16, 4
      %s173 = int_to_ptr.hbm [resolvable:$true] %s172
      %s174 = sshll.u32 [#allocation20], 4
      %s175 = int_to_ptr.vmem [resolvable:$true] %s174
      %177 = dma.hbm_to_vmem [thread:$0]  %s173, 32, %s175, [#allocation21]
    $region69: #{flow_matching_forward.1} parent=1 // pred_fallthru
      _
    // Predicated region
    $region70: #{flow_matching_forward.1} parent=1 // pred_check
      _
    $region71: #{flow_matching_forward.1} parent=1 // pred_check_branch
      %179 = sbr.rel (0) target = $region73
    $region72: #{flow_matching_forward.1} parent=1 // pred_region
      %181 = dma.done [#allocation3], 256
    $region73: #{flow_matching_forward.1} parent=1 // pred_fallthru
      _
    // Predicated region
    $region74: #{flow_matching_forward.1} parent=1 // pred_check
      _
    $region75: #{flow_matching_forward.1} parent=1 // pred_check_branch
      %183 = sbr.rel (0) target = $region77
    $region76: #{flow_matching_forward.1} parent=1 // pred_region
      %185 = dma.done [#allocation6], 16
    $region77: #{flow_matching_forward.1} parent=1 // pred_fallthru
      _
    // Predicated region
    $region78: #{flow_matching_forward.1} parent=1 // pred_check
      _
    $region79: #{flow_matching_forward.1} parent=1 // pred_check_branch
      %187 = sbr.rel (0) target = $region81
    $region80: #{flow_matching_forward.1} parent=1 // pred_region
      %189 = dma.done [#allocation6], 2048
    $region81: #{flow_matching_forward.1} parent=1 // pred_fallthru
      _
    // Predicated region
    $region82: #{flow_matching_forward.1} parent=1 // pred_check
      _
    $region83: #{flow_matching_forward.1} parent=1 // pred_check_branch
      %191 = sbr.rel (0) target = $region85
    $region84: #{flow_matching_forward.1} parent=1 // pred_region
      %193 = dma.done [#allocation9], 16
    $region85: #{flow_matching_forward.1} parent=1 // pred_fallthru
      _
    // Predicated region
    $region86: #{flow_matching_forward.1} parent=1 // pred_check
      _
    $region87: #{flow_matching_forward.1} parent=1 // pred_check_branch
      %195 = sbr.rel (0) target = $region89
    $region88: #{flow_matching_forward.1} parent=1 // pred_region
      %197 = dma.done [#allocation9], 16
    $region89: #{flow_matching_forward.1} parent=1 // pred_fallthru
      _
    // Predicated region
    $region90: #{flow_matching_forward.1} parent=1 // pred_check
      _
    $region91: #{flow_matching_forward.1} parent=1 // pred_check_branch
      %199 = sbr.rel (0) target = $region93
    $region92: #{flow_matching_forward.1} parent=1 // pred_region
      %201 = dma.done [#allocation12], 16
    $region93: #{flow_matching_forward.1} parent=1 // pred_fallthru
      _
    // Predicated region
    $region94: #{flow_matching_forward.1} parent=1 // pred_check
      _
    $region95: #{flow_matching_forward.1} parent=1 // pred_check_branch
      %203 = sbr.rel (0) target = $region97
    $region96: #{flow_matching_forward.1} parent=1 // pred_region
      %205 = dma.done [#allocation12], 1024
    $region97: #{flow_matching_forward.1} parent=1 // pred_fallthru
      _
    // Predicated region
    $region98: #{flow_matching_forward.1} parent=1 // pred_check
      _
    $region99: #{flow_matching_forward.1} parent=1 // pred_check_branch
      %207 = sbr.rel (0) target = $region101
    $region100: #{flow_matching_forward.1} parent=1 // pred_region
      %209 = dma.done [#allocation15], 16
    $region101: #{flow_matching_forward.1} parent=1 // pred_fallthru
      _
    // Predicated region
    $region102: #{flow_matching_forward.1} parent=1 // pred_check
      _
    $region103: #{flow_matching_forward.1} parent=1 // pred_check_branch
      %211 = sbr.rel (0) target = $region105
    $region104: #{flow_matching_forward.1} parent=1 // pred_region
      %213 = dma.done [#allocation15], 16
    $region105: #{flow_matching_forward.1} parent=1 // pred_fallthru
      _
    // Predicated region
    $region106: #{flow_matching_forward.1} parent=1 // pred_check
      _
    $region107: #{flow_matching_forward.1} parent=1 // pred_check_branch
      %215 = sbr.rel (0) target = $region109
    $region108: #{flow_matching_forward.1} parent=1 // pred_region
      %217 = dma.done [#allocation18], 16
    $region109: #{flow_matching_forward.1} parent=1 // pred_fallthru
      _
    // Predicated region
    $region110: #{flow_matching_forward.1} parent=1 // pred_check
      _
    $region111: #{flow_matching_forward.1} parent=1 // pred_check_branch
      %219 = sbr.rel (0) target = $region113
    $region112: #{flow_matching_forward.1} parent=1 // pred_region
      %221 = dma.done [#allocation18], 2048
    $region113: #{flow_matching_forward.1} parent=1 // pred_fallthru
      _
    // Predicated region
    $region114: #{flow_matching_forward.1} parent=1 // pred_check
      _
    $region115: #{flow_matching_forward.1} parent=1 // pred_check_branch
      %223 = sbr.rel (0) target = $region117
    $region116: #{flow_matching_forward.1} parent=1 // pred_region
      %225 = dma.done [#allocation21], 32
    $region117: #{flow_matching_forward.1} parent=1 // pred_fallthru
      _
    %v227 = vld [vmem:[#allocation2] sm:$0xff]
    %v228 = vld [vmem:[#allocation2 + $0x8] sm:$0xff]
    %v229 = vld [vmem:[%s1] sm:$0xff]
    %v230 = vld [vmem:[%s4] sm:$0x1]
    %232 = vset.pattern.permute.xlu0 0
    %233 = vperm.xlu0 %232, %v229
    %v234 = vpop.permute.xlu0 %233
    %v237 = vperm.slane %v230, 0
    %v239 = vmul.f32 %v234, %v237
    %v240 = vld [vmem:[#allocation5] sm:$0x1]
    %v242 = vperm.slane %v240, 0
    %v244 = vadd.f32 %v239, %v242
    %v245 = vsub.f32 0.0, %v244
    %v246 = vmul.f32 %v245, 1.442695
    %v247 = vpow.pop %v246
    %v248 = vadd.f32 %v247, 1.0
    %v249 = vrcp.pop %v248
    %v250 = vmul.f32 %v248, %v249
    %v251 = vsub.f32 1.0, %v250
    %v252 = vmul.f32 %v249, %v251
    %v253 = vadd.f32 %v249, %v252
    %vm254 = vweird.f32 %v248
    %vm255 = vweird.f32 %v249
    %vm256 = vmor %vm254, %vm255
    %v257 = vsel %vm256, %v249, %v253
    %v258 = vand.u32 2147483647, %v248
    %vm259 = vcmp.eq.f32.partialorder %v258, 8.507059e+37
    %v260 = vand.u32 %v248, 2147483648
    %v261 = vor.u32 1.1754944e-38, %v260
    %v262 = vsel %vm259, %v261, %v257
    %v263 = vmul.f32 %v244, %v262
    %v264 = vpack.c.bf16 %v263, %v263
    %v265 = vld [vmem:[%s7] sm:$0xf]
    %v266 = vld [vmem:[%s7 + $0x4] sm:$0xf]
    %v267 = vld [vmem:[%s7 + $0x8] sm:$0xf]
    %v268 = vld [vmem:[%s7 + $0xc] sm:$0xf]
    %v273 = vunpack.c.l.b16 %v265
    %v274 = vunpack.c.l.b16 %v266
    %v275 = vunpack.c.l.b16 %v267
    %v276 = vunpack.c.l.b16 %v268
    %v277 = vpack.c.b16 %v274, %v273
    %v278 = vpack.c.b16 %v276, %v275
    %vm281 = vcmask 261120
    %v283 = vsel %vm281, %v264, 0
    %285 = vmatpush.bf16.msra.mxu0 0
    %286 = vmatpush.bf16.msra.mxu0 0
    %287 = vmatpush.bf16.msra.mxu0 0
    %288 = vmatpush.bf16.msra.mxu0 0
    %289 = vmatpush.bf16.msra.mxu0 0
    %290 = vmatpush.bf16.msra.mxu0 0
    %291 = vmatpush.bf16.msra.mxu0 %v278
    %292 = vmatpush.bf16.msra.mxu0 %v277
    %293 = vmatmul.bf16.gmra.mxu0 %v283
    %v294 = vpop.f32.mrf.mxu0
    %v295 = vadd.f32 0.0, %v294
    %v296 = vpop.f32.mrf.mxu0
    %297 = vdwg.mxu0
    %v298 = vld [vmem:[%s2] sm:$0x3]
    %v299 = vld [vmem:[%s3] sm:$0x3]
    %v300 = vld [vmem:[#allocation7] sm:$0xf]
    %v301 = vld [vmem:[#allocation7 + $0x4] sm:$0xf]
    %v302 = vld [vmem:[#allocation7 + $0x8] sm:$0xf]
    %v303 = vld [vmem:[#allocation7 + $0xc] sm:$0xf]
    %v304 = vld [vmem:[#allocation7 + $0x10] sm:$0xf]
    %v305 = vld [vmem:[#allocation7 + $0x14] sm:$0xf]
    %v306 = vld [vmem:[#allocation7 + $0x18] sm:$0xf]
    %v307 = vld [vmem:[#allocation7 + $0x1c] sm:$0xf]
    %v308 = vld [vmem:[#allocation7 + $0x20] sm:$0xf]
    %v309 = vld [vmem:[#allocation7 + $0x24] sm:$0xf]
    %v310 = vld [vmem:[#allocation7 + $0x28] sm:$0xf]
    %v311 = vld [vmem:[#allocation7 + $0x2c] sm:$0xf]
    %v312 = vld [vmem:[#allocation7 + $0x30] sm:$0xf]
    %v313 = vld [vmem:[#allocation7 + $0x34] sm:$0xf]
    %v314 = vld [vmem:[#allocation7 + $0x38] sm:$0xf]
    %v315 = vld [vmem:[#allocation7 + $0x3c] sm:$0xf]
    %v316 = vld [vmem:[#allocation7 + $0x40] sm:$0xf]
    %v317 = vld [vmem:[#allocation7 + $0x44] sm:$0xf]
    %v318 = vld [vmem:[#allocation7 + $0x48] sm:$0xf]
    %v319 = vld [vmem:[#allocation7 + $0x4c] sm:$0xf]
    %v320 = vld [vmem:[#allocation7 + $0x50] sm:$0xf]
    %v321 = vld [vmem:[#allocation7 + $0x54] sm:$0xf]
    %v322 = vld [vmem:[#allocation7 + $0x58] sm:$0xf]
    %v323 = vld [vmem:[#allocation7 + $0x5c] sm:$0xf]
    %v324 = vld [vmem:[#allocation7 + $0x60] sm:$0xf]
    %v325 = vld [vmem:[#allocation7 + $0x64] sm:$0xf]
    %v326 = vld [vmem:[#allocation7 + $0x68] sm:$0xf]
    %v327 = vld [vmem:[#allocation7 + $0x6c] sm:$0xf]
    %v328 = vld [vmem:[#allocation7 + $0x70] sm:$0xf]
    %v329 = vld [vmem:[#allocation7 + $0x74] sm:$0xf]
    %v330 = vld [vmem:[#allocation7 + $0x78] sm:$0xf]
    %v331 = vld [vmem:[#allocation7 + $0x7c] sm:$0xf]
    %v332 = vld [vmem:[#allocation8] sm:$0x1]
    %v333 = vld [vmem:[#allocation10] sm:$0x1]
    %v334 = vld [vmem:[#allocation11] sm:$0x1]
    %v335 = vld [vmem:[#allocation13] sm:$0xf]
    %v336 = vld [vmem:[#allocation13 + $0x4] sm:$0xf]
    %v337 = vld [vmem:[#allocation13 + $0x8] sm:$0xf]
    %v338 = vld [vmem:[#allocation13 + $0xc] sm:$0xf]
    %v339 = vld [vmem:[#allocation13 + $0x10] sm:$0xf]
    %v340 = vld [vmem:[#allocation13 + $0x14] sm:$0xf]
    %v341 = vld [vmem:[#allocation13 + $0x18] sm:$0xf]
    %v342 = vld [vmem:[#allocation13 + $0x1c] sm:$0xf]
    %v343 = vld [vmem:[#allocation13 + $0x20] sm:$0xf]
    %v344 = vld [vmem:[#allocation13 + $0x24] sm:$0xf]
    %v345 = vld [vmem:[#allocation13 + $0x28] sm:$0xf]
    %v346 = vld [vmem:[#allocation13 + $0x2c] sm:$0xf]
    %v347 = vld [vmem:[#allocation13 + $0x30] sm:$0xf]
    %v348 = vld [vmem:[#allocation13 + $0x34] sm:$0xf]
    %v349 = vld [vmem:[#allocation13 + $0x38] sm:$0xf]
    %v350 = vld [vmem:[#allocation13 + $0x3c] sm:$0xf]
    %v351 = vld [vmem:[#allocation14] sm:$0x1]
    %v352 = vld [vmem:[#allocation16] sm:$0x1]
    %v353 = vld [vmem:[#allocation17] sm:$0x1]
    %v354 = vld [vmem:[#allocation19] sm:$0xff]
    %v355 = vld [vmem:[#allocation19 + $0x8] sm:$0xff]
    %v356 = vld [vmem:[#allocation19 + $0x10] sm:$0xff]
    %v357 = vld [vmem:[#allocation19 + $0x18] sm:$0xff]
    %v358 = vld [vmem:[#allocation19 + $0x20] sm:$0xff]
    %v359 = vld [vmem:[#allocation19 + $0x28] sm:$0xff]
    %v360 = vld [vmem:[#allocation19 + $0x30] sm:$0xff]
    %v361 = vld [vmem:[#allocation19 + $0x38] sm:$0xff]
    %v362 = vld [vmem:[#allocation19 + $0x40] sm:$0xff]
    %v363 = vld [vmem:[#allocation19 + $0x48] sm:$0xff]
    %v364 = vld [vmem:[#allocation19 + $0x50] sm:$0xff]
    %v365 = vld [vmem:[#allocation19 + $0x58] sm:$0xff]
    %v366 = vld [vmem:[#allocation19 + $0x60] sm:$0xff]
    %v367 = vld [vmem:[#allocation19 + $0x68] sm:$0xff]
    %v368 = vld [vmem:[#allocation19 + $0x70] sm:$0xff]
    %v369 = vld [vmem:[#allocation19 + $0x78] sm:$0xff]
    %v370 = vld [vmem:[#allocation20] sm:$0x3]
    %v371 = vadd.f32 %v227, %v228
    %372 = vadd.xlane.f32.xlu0 %v371
    %v373 = vpop.xlane.xlu0 %372
    %v374 = vrcp.pop 256.0
    %v375 = vmul.f32 256.0, %v374
    %v376 = vsub.f32 1.0, %v375
    %v377 = vmul.f32 %v374, %v376
    %v378 = vadd.f32 %v374, %v377
    %vm379 = vweird.f32 %v374
    %v380 = vsel %vm379, %v374, %v378
    %v381 = vmul.f32 %v373, %v380
    %v382 = vsub.f32 %v227, %v381
    %v383 = vsub.f32 %v228, %v381
    %v384 = vmul.f32 %v382, %v382
    %v385 = vmul.f32 %v383, %v383
    %v386 = vadd.f32 %v384, %v385
    %387 = vadd.xlane.f32.xlu0 %v386
    %v388 = vpop.xlane.xlu0 %387
    %v389 = vmul.f32 %v388, %v380
    %v390 = vadd.f32 %v389, 1e-05
    %v391 = vrsqrt.pop %v390
    %v392 = vmul.f32 %v391, %v390
    %v393 = vmul.f32 %v392, %v391
    %v394 = vmul.f32 0.5, %v393
    %v395 = vsub.f32 1.5, %v394
    %v396 = vmul.f32 %v391, %v395
    %vm397 = vweird.f32 %v390
    %vm398 = vweird.f32 %v391
    %vm399 = vmor %vm397, %vm398
    %v400 = vsel %vm399, %v391, %v396
    %v401 = vmul.f32 %v382, %v400
    %v402 = vmul.f32 %v383, %v400
    %v404 = vperm.slane %v298, 0
    %v405 = vperm.slane %v298, 1
    %v408 = vmul.f32 %v401, %v404
    %v409 = vmul.f32 %v402, %v405
    %v411 = vperm.slane %v299, 0
    %v412 = vperm.slane %v299, 1
    %v415 = vadd.f32 %v408, %v411
    %v416 = vadd.f32 %v409, %v412
    %v417 = vpack.c.bf16 %v415, %v415
    %v418 = vpack.c.bf16 %v416, %v416
    %v451 = vunpack.c.l.b16 %v300
    %v452 = vunpack.c.l.b16 %v301
    %v453 = vunpack.c.l.b16 %v302
    %v454 = vunpack.c.l.b16 %v303
    %v455 = vunpack.c.l.b16 %v304
    %v456 = vunpack.c.l.b16 %v305
    %v457 = vunpack.c.l.b16 %v306
    %v458 = vunpack.c.l.b16 %v307
    %v459 = vunpack.c.l.b16 %v308
    %v460 = vunpack.c.l.b16 %v309
    %v461 = vunpack.c.l.b16 %v310
    %v462 = vunpack.c.l.b16 %v311
    %v463 = vunpack.c.l.b16 %v312
    %v464 = vunpack.c.l.b16 %v313
    %v465 = vunpack.c.l.b16 %v314
    %v466 = vunpack.c.l.b16 %v315
    %v467 = vunpack.c.l.b16 %v316
    %v468 = vunpack.c.l.b16 %v317
    %v469 = vunpack.c.l.b16 %v318
    %v470 = vunpack.c.l.b16 %v319
    %v471 = vunpack.c.l.b16 %v320
    %v472 = vunpack.c.l.b16 %v321
    %v473 = vunpack.c.l.b16 %v322
    %v474 = vunpack.c.l.b16 %v323
    %v475 = vunpack.c.l.b16 %v324
    %v476 = vunpack.c.l.b16 %v325
    %v477 = vunpack.c.l.b16 %v326
    %v478 = vunpack.c.l.b16 %v327
    %v479 = vunpack.c.l.b16 %v328
    %v480 = vunpack.c.l.b16 %v329
    %v481 = vunpack.c.l.b16 %v330
    %v482 = vunpack.c.l.b16 %v331
    %v483 = vpack.c.b16 %v452, %v451
    %v484 = vpack.c.b16 %v454, %v453
    %v485 = vpack.c.b16 %v456, %v455
    %v486 = vpack.c.b16 %v458, %v457
    %v487 = vpack.c.b16 %v460, %v459
    %v488 = vpack.c.b16 %v462, %v461
    %v489 = vpack.c.b16 %v464, %v463
    %v490 = vpack.c.b16 %v466, %v465
    %v491 = vpack.c.b16 %v468, %v467
    %v492 = vpack.c.b16 %v470, %v469
    %v493 = vpack.c.b16 %v472, %v471
    %v494 = vpack.c.b16 %v474, %v473
    %v495 = vpack.c.b16 %v476, %v475
    %v496 = vpack.c.b16 %v478, %v477
    %v497 = vpack.c.b16 %v480, %v479
    %v498 = vpack.c.b16 %v482, %v481
    %515 = vmatpush.bf16.msra.mxu0 %v490
    %516 = vmatpush.bf16.msra.mxu0 %v489
    %517 = vmatpush.bf16.msra.mxu0 %v488
    %518 = vmatpush.bf16.msra.mxu0 %v487
    %519 = vmatpush.bf16.msra.mxu0 %v486
    %520 = vmatpush.bf16.msra.mxu0 %v485
    %521 = vmatpush.bf16.msra.mxu0 %v484
    %522 = vmatpush.bf16.msra.mxu0 %v483
    %523 = vmatmul.bf16.gmra.mxu0 %v417
    %v524 = vpop.f32.mrf.mxu0
    %v525 = vadd.f32 %v295, %v524
    %v526 = vpop.f32.mrf.mxu0
    %527 = vdwg.mxu0
    %528 = vmatpush.bf16.msra.mxu0 %v498
    %529 = vmatpush.bf16.msra.mxu0 %v497
    %530 = vmatpush.bf16.msra.mxu0 %v496
    %531 = vmatpush.bf16.msra.mxu0 %v495
    %532 = vmatpush.bf16.msra.mxu0 %v494
    %533 = vmatpush.bf16.msra.mxu0 %v493
    %534 = vmatpush.bf16.msra.mxu0 %v492
    %535 = vmatpush.bf16.msra.mxu0 %v491
    %536 = vmatmul.bf16.gmra.mxu0 %v418
    %v537 = vpop.f32.mrf.mxu0
    %v538 = vadd.f32 %v525, %v537
    %v539 = vpop.f32.mrf.mxu0
    %540 = vdwg.mxu0
    %v542 = vperm.slane %v332, 0
    %v544 = vadd.f32 %v538, %v542
    %545 = vadd.xlane.f32.xlu0 %v544
    %v546 = vpop.xlane.xlu0 %545
    %v547 = vrcp.pop 128.0
    %v548 = vmul.f32 128.0, %v547
    %v549 = vsub.f32 1.0, %v548
    %v550 = vmul.f32 %v547, %v549
    %v551 = vadd.f32 %v547, %v550
    %vm552 = vweird.f32 %v547
    %v553 = vsel %vm552, %v547, %v551
    %v554 = vmul.f32 %v546, %v553
    %v555 = vsub.f32 %v544, %v554
    %v556 = vmul.f32 %v555, %v555
    %557 = vadd.xlane.f32.xlu0 %v556
    %v558 = vpop.xlane.xlu0 %557
    %v559 = vmul.f32 %v558, %v553
    %v560 = vadd.f32 %v559, 1e-05
    %v561 = vrsqrt.pop %v560
    %v562 = vmul.f32 %v561, %v560
    %v563 = vmul.f32 %v562, %v561
    %v564 = vmul.f32 0.5, %v563
    %v565 = vsub.f32 1.5, %v564
    %v566 = vmul.f32 %v561, %v565
    %vm567 = vweird.f32 %v560
    %vm568 = vweird.f32 %v561
    %vm569 = vmor %vm567, %vm568
    %v570 = vsel %vm569, %v561, %v566
    %v571 = vmul.f32 %v555, %v570
    %v573 = vperm.slane %v333, 0
    %v575 = vmul.f32 %v571, %v573
    %v577 = vperm.slane %v334, 0
    %v579 = vadd.f32 %v575, %v577
    %v580 = vmul.f32 %v579, 0.5
    %v581 = vmul.f32 %v579, 0.70710677
    %v582 = vmul.f32 %v581, %v581
    %v583 = vmin.f32 16.0, %v582
    %v584 = vmul.f32 %v583, 2.1237322e-06
    %v585 = vadd.f32 %v584, 0.00028619796
    %v586 = vmul.f32 %v583, %v585
    %v587 = vadd.f32 %v586, 0.0036580483
    %v588 = vmul.f32 %v583, %v587
    %v589 = vadd.f32 %v588, 0.05243302
    %v590 = vmul.f32 %v583, %v589
    %v591 = vadd.f32 %v590, 0.18741608
    %v592 = vmul.f32 %v583, %v591
    %v593 = vadd.f32 %v592, 1.1283791
    %v594 = vmul.f32 %v581, %v593
    %v595 = vmul.f32 %v583, 3.8918573e-05
    %v596 = vadd.f32 %v595, 0.001143296
    %v597 = vmul.f32 %v583, %v596
    %v598 = vadd.f32 %v597, 0.014752088
    %v599 = vmul.f32 %v583, %v598
    %v600 = vadd.f32 %v599, 0.112945676
    %v601 = vmul.f32 %v583, %v600
    %v602 = vadd.f32 %v601, 0.4994258
    %v603 = vmul.f32 %v583, %v602
    %v604 = vadd.f32 %v603, 1.0
    %v605 = vrcp.pop %v604
    %v606 = vmul.f32 %v604, %v605
    %v607 = vsub.f32 1.0, %v606
    %v608 = vmul.f32 %v605, %v607
    %v609 = vadd.f32 %v605, %v608
    %vm610 = vweird.f32 %v604
    %vm611 = vweird.f32 %v605
    %vm612 = vmor %vm610, %vm611
    %v613 = vsel %vm612, %v605, %v609
    %v614 = vand.u32 2147483647, %v604
    %vm615 = vcmp.eq.f32.partialorder %v614, 8.507059e+37
    %v616 = vand.u32 %v604, 2147483648
    %v617 = vor.u32 1.1754944e-38, %v616
    %v618 = vsel %vm615, %v617, %v613
    %v619 = vmul.f32 %v594, %v618
    %v620 = vmin.f32 %v619, 1.0
    %v621 = vmax.f32 %v620, -1.0
    %v622 = vadd.f32 %v621, 1.0
    %v623 = vmul.f32 %v580, %v622
    %v624 = vpack.c.bf16 %v623, %v623
    %v626 = vperm.slane %v351, 0
    %v644 = vunpack.c.l.b16 %v335
    %v645 = vunpack.c.l.b16 %v336
    %v646 = vunpack.c.l.b16 %v337
    %v647 = vunpack.c.l.b16 %v338
    %v648 = vunpack.c.l.b16 %v339
    %v649 = vunpack.c.l.b16 %v340
    %v650 = vunpack.c.l.b16 %v341
    %v651 = vunpack.c.l.b16 %v342
    %v652 = vunpack.c.l.b16 %v343
    %v653 = vunpack.c.l.b16 %v344
    %v654 = vunpack.c.l.b16 %v345
    %v655 = vunpack.c.l.b16 %v346
    %v656 = vunpack.c.l.b16 %v347
    %v657 = vunpack.c.l.b16 %v348
    %v658 = vunpack.c.l.b16 %v349
    %v659 = vunpack.c.l.b16 %v350
    %v660 = vpack.c.b16 %v645, %v644
    %v661 = vpack.c.b16 %v647, %v646
    %v662 = vpack.c.b16 %v649, %v648
    %v663 = vpack.c.b16 %v651, %v650
    %v664 = vpack.c.b16 %v653, %v652
    %v665 = vpack.c.b16 %v655, %v654
    %v666 = vpack.c.b16 %v657, %v656
    %v667 = vpack.c.b16 %v659, %v658
    %676 = vmatpush.bf16.msra.mxu0 %v667
    %677 = vmatpush.bf16.msra.mxu0 %v666
    %678 = vmatpush.bf16.msra.mxu0 %v665
    %679 = vmatpush.bf16.msra.mxu0 %v664
    %680 = vmatpush.bf16.msra.mxu0 %v663
    %681 = vmatpush.bf16.msra.mxu0 %v662
    %682 = vmatpush.bf16.msra.mxu0 %v661
    %683 = vmatpush.bf16.msra.mxu0 %v660
    %684 = vmatmul.bf16.gmra.mxu0 %v624
    %v685 = vpop.f32.mrf.mxu0
    %v686 = vadd.f32 %v626, %v685
    %v687 = vpop.f32.mrf.mxu0
    %688 = vdwg.mxu0
    %689 = vadd.xlane.f32.xlu0 %v686
    %v690 = vpop.xlane.xlu0 %689
    %v691 = vmul.f32 %v690, %v553
    %v692 = vsub.f32 %v686, %v691
    %v693 = vmul.f32 %v692, %v692
    %694 = vadd.xlane.f32.xlu0 %v693
    %v695 = vpop.xlane.xlu0 %694
    %v696 = vmul.f32 %v695, %v553
    %v697 = vadd.f32 %v696, 1e-05
    %v698 = vrsqrt.pop %v697
    %v699 = vmul.f32 %v698, %v697
    %v700 = vmul.f32 %v699, %v698
    %v701 = vmul.f32 0.5, %v700
    %v702 = vsub.f32 1.5, %v701
    %v703 = vmul.f32 %v698, %v702
    %vm704 = vweird.f32 %v697
    %vm705 = vweird.f32 %v698
    %vm706 = vmor %vm704, %vm705
    %v707 = vsel %vm706, %v698, %v703
    %v708 = vmul.f32 %v692, %v707
    %v710 = vperm.slane %v352, 0
    %v712 = vmul.f32 %v708, %v710
    %v714 = vperm.slane %v353, 0
    %v716 = vadd.f32 %v712, %v714
    %v717 = vmul.f32 %v716, 0.5
    %v718 = vmul.f32 %v716, 0.70710677
    %v719 = vmul.f32 %v718, %v718
    %v720 = vmin.f32 16.0, %v719
    %v721 = vmul.f32 %v720, 2.1237322e-06
    %v722 = vadd.f32 %v721, 0.00028619796
    %v723 = vmul.f32 %v720, %v722
    %v724 = vadd.f32 %v723, 0.0036580483
    %v725 = vmul.f32 %v720, %v724
    %v726 = vadd.f32 %v725, 0.05243302
    %v727 = vmul.f32 %v720, %v726
    %v728 = vadd.f32 %v727, 0.18741608
    %v729 = vmul.f32 %v720, %v728
    %v730 = vadd.f32 %v729, 1.1283791
    %v731 = vmul.f32 %v718, %v730
    %v732 = vmul.f32 %v720, 3.8918573e-05
    %v733 = vadd.f32 %v732, 0.001143296
    %v734 = vmul.f32 %v720, %v733
    %v735 = vadd.f32 %v734, 0.014752088
    %v736 = vmul.f32 %v720, %v735
    %v737 = vadd.f32 %v736, 0.112945676
    %v738 = vmul.f32 %v720, %v737
    %v739 = vadd.f32 %v738, 0.4994258
    %v740 = vmul.f32 %v720, %v739
    %v741 = vadd.f32 %v740, 1.0
    %v742 = vrcp.pop %v741
    %v743 = vmul.f32 %v741, %v742
    %v744 = vsub.f32 1.0, %v743
    %v745 = vmul.f32 %v742, %v744
    %v746 = vadd.f32 %v742, %v745
    %vm747 = vweird.f32 %v741
    %vm748 = vweird.f32 %v742
    %vm749 = vmor %vm747, %vm748
    %v750 = vsel %vm749, %v742, %v746
    %v751 = vand.u32 2147483647, %v741
    %vm752 = vcmp.eq.f32.partialorder %v751, 8.507059e+37
    %v753 = vand.u32 %v741, 2147483648
    %v754 = vor.u32 1.1754944e-38, %v753
    %v755 = vsel %vm752, %v754, %v750
    %v756 = vmul.f32 %v731, %v755
    %v757 = vmin.f32 %v756, 1.0
    %v758 = vmax.f32 %v757, -1.0
    %v759 = vadd.f32 %v758, 1.0
    %v760 = vmul.f32 %v717, %v759
    %v761 = vpack.c.bf16 %v760, %v760
    %v763 = vperm.slane %v370, 0
    %v764 = vperm.slane %v370, 1
    %v783 = vunpack.c.l.b16 %v354
    %v784 = vunpack.c.h.b16 %v354
    %v785 = vunpack.c.l.b16 %v355
    %v786 = vunpack.c.h.b16 %v355
    %v787 = vunpack.c.l.b16 %v356
    %v788 = vunpack.c.h.b16 %v356
    %v789 = vunpack.c.l.b16 %v357
    %v790 = vunpack.c.h.b16 %v357
    %v791 = vunpack.c.l.b16 %v358
    %v792 = vunpack.c.h.b16 %v358
    %v793 = vunpack.c.l.b16 %v359
    %v794 = vunpack.c.h.b16 %v359
    %v795 = vunpack.c.l.b16 %v360
    %v796 = vunpack.c.h.b16 %v360
    %v797 = vunpack.c.l.b16 %v361
    %v798 = vunpack.c.h.b16 %v361
    %v799 = vunpack.c.l.b16 %v362
    %v800 = vunpack.c.h.b16 %v362
    %v801 = vunpack.c.l.b16 %v363
    %v802 = vunpack.c.h.b16 %v363
    %v803 = vunpack.c.l.b16 %v364
    %v804 = vunpack.c.h.b16 %v364
    %v805 = vunpack.c.l.b16 %v365
    %v806 = vunpack.c.h.b16 %v365
    %v807 = vunpack.c.l.b16 %v366
    %v808 = vunpack.c.h.b16 %v366
    %v809 = vunpack.c.l.b16 %v367
    %v810 = vunpack.c.h.b16 %v367
    %v811 = vunpack.c.l.b16 %v368
    %v812 = vunpack.c.h.b16 %v368
    %v813 = vunpack.c.l.b16 %v369
    %v814 = vunpack.c.h.b16 %v369
    %v815 = vpack.c.b16 %v785, %v783
    %v816 = vpack.c.b16 %v786, %v784
    %v817 = vpack.c.b16 %v789, %v787
    %v818 = vpack.c.b16 %v790, %v788
    %v819 = vpack.c.b16 %v793, %v791
    %v820 = vpack.c.b16 %v794, %v792
    %v821 = vpack.c.b16 %v797, %v795
    %v822 = vpack.c.b16 %v798, %v796
    %v823 = vpack.c.b16 %v801, %v799
    %v824 = vpack.c.b16 %v802, %v800
    %v825 = vpack.c.b16 %v805, %v803
    %v826 = vpack.c.b16 %v806, %v804
    %v827 = vpack.c.b16 %v809, %v807
    %v828 = vpack.c.b16 %v810, %v808
    %v829 = vpack.c.b16 %v813, %v811
    %v830 = vpack.c.b16 %v814, %v812
    %847 = vmatpush.bf16.msra.mxu0 %v829
    %848 = vmatpush.bf16.msra.mxu0 %v827
    %849 = vmatpush.bf16.msra.mxu0 %v825
    %850 = vmatpush.bf16.msra.mxu0 %v823
    %851 = vmatpush.bf16.msra.mxu0 %v821
    %852 = vmatpush.bf16.msra.mxu0 %v819
    %853 = vmatpush.bf16.msra.mxu0 %v817
    %854 = vmatpush.bf16.msra.mxu0 %v815
    %855 = vmatmul.bf16.gmra.mxu0 %v761
    %v856 = vpop.f32.mrf.mxu0
    %v857 = vadd.f32 %v763, %v856
    %v858 = vpop.f32.mrf.mxu0
    %859 = vdwg.mxu0
    %860 = vmatpush.bf16.msra.mxu0 %v830
    %861 = vmatpush.bf16.msra.mxu0 %v828
    %862 = vmatpush.bf16.msra.mxu0 %v826
    %863 = vmatpush.bf16.msra.mxu0 %v824
    %864 = vmatpush.bf16.msra.mxu0 %v822
    %865 = vmatpush.bf16.msra.mxu0 %v820
    %866 = vmatpush.bf16.msra.mxu0 %v818
    %867 = vmatpush.bf16.msra.mxu0 %v816
    %868 = vmatmul.bf16.gmra.mxu0 %v761
    %v869 = vpop.f32.mrf.mxu0
    %v870 = vadd.f32 %v764, %v869
    %v871 = vpop.f32.mrf.mxu0
    %872 = vdwg.mxu0
    %873 = vst [vmem:[#allocation22] sm:$0xff] %v857
    %874 = vst [vmem:[#allocation22 + $0x8] sm:$0xff] %v870
    // Predicated region
    $region118: #{flow_matching_forward.1} parent=1 // pred_check
      _
    $region119: #{flow_matching_forward.1} parent=1 // pred_check_branch
      %876 = sbr.rel (0) target = $region121
    $region120: #{flow_matching_forward.1} parent=1 // pred_region
      %878 = vsyncadd [#allocation4], 0
      %s880 = sshll.u32 [#allocation22], 4
      %s881 = int_to_ptr.vmem [resolvable:$true] %s880
      %s882 = sshll.u32 %s17, 4
      %s883 = int_to_ptr.hbm [resolvable:$true] %s882
      %885 = dma.vmem_to_hbm [thread:$0]  %s881, 256, %s883, [#allocation4]
    $region121: #{flow_matching_forward.1} parent=1 // pred_fallthru
      _
    // Predicated region
    $region122: #{flow_matching_forward.1} parent=1 // pred_check
      _
    $region123: #{flow_matching_forward.1} parent=1 // pred_check_branch
      %887 = sbr.rel (0) target = $region125
    $region124: #{flow_matching_forward.1} parent=1 // pred_region
      %889 = dma.done [#allocation4], 256
    $region125: #{flow_matching_forward.1} parent=1 // pred_fallthru
      _
    %890 = vsyncpa [#allocation3], 1
    %891 = vsyncpa [#allocation6], 1
    %892 = vsyncpa [#allocation9], 1
    %893 = vsyncpa [#allocation12], 1
    %894 = vsyncpa [#allocation15], 1
    %895 = vsyncpa [#allocation18], 1
    %896 = vsyncpa [#allocation21], 1
    %897 = vsyncpa [#allocation4], 1

</llo_original>
